<compile_context>
chip_gen: v5e
topology: v5e:2x2
jax: 0.10.0
libtpu: 0.0.40
codegen_flags: <defaults>
</compile_context>

<pallas_src>
import functools

import jax
import jax.numpy as jnp
import numpy as np
from jax.experimental import pallas as pl
from jax.experimental.pallas import tpu as pltpu


def _dice_sums_kernel(x_ref, t_ref, out_ref, acc_i, acc_p, acc_t,
                      *, gamma, hw, need_mask):
    j = pl.program_id(1)

    @pl.when(j == 0)
    def _():
        acc_i[...] = jnp.zeros_like(acc_i)
        acc_p[...] = jnp.zeros_like(acc_p)
        acc_t[...] = jnp.zeros_like(acc_t)

    logits = x_ref[...].astype(jnp.float32)           # (C, tn)
    C, tn = logits.shape

    # Numerically-stable softmax over the class (sublane) axis.  Exact divide
    # (not the approx EUP reciprocal) to keep tight agreement with the
    # reference; the kernel is memory-bound so the divide is hidden.
    m = jnp.max(logits, axis=0, keepdims=True)        # (1, tn)
    e = jnp.exp(logits - m)
    p = e / jnp.sum(e, axis=0, keepdims=True)         # (C, tn)

    # One-hot of integer targets against per-sublane class ids.
    t = t_ref[...]                                    # (1, tn) int32
    class_ids = jax.lax.broadcasted_iota(jnp.int32, (C, tn), 0)
    onehot = t == class_ids                           # (C, tn) bool

    if need_mask:
        # The last pixel tile may run past H*W; padded lanes hold unspecified
        # data, so *select* (never multiply: 0 * NaN = NaN) to keep garbage
        # out of the sums.
        lane = jax.lax.broadcasted_iota(jnp.int32, (1, tn), 1)
        valid = (j * tn + lane) < hw                  # (1, tn)
        p = jnp.where(valid, p, 0.0)
        onehot = jnp.logical_and(onehot, valid)

    onehot_f = onehot.astype(jnp.float32)

    if gamma == 2:
        p_pow = p * p
    elif gamma == 1:
        p_pow = p
    else:
        p_pow = jnp.power(p, jnp.float32(gamma))
    # onehot ** gamma == onehot for values in {0, 1} and gamma > 0.

    acc_i[...] += jnp.sum(p * onehot_f, axis=1, keepdims=True)   # (C, 1)
    acc_p[...] += jnp.sum(p_pow, axis=1, keepdims=True)          # (C, 1)
    acc_t[...] += jnp.sum(onehot_f, axis=1, keepdims=True)       # (C, 1)

    # Single store of the (C, 3) partials for this batch element.
    @pl.when(j == pl.num_programs(1) - 1)
    def _():
        out_ref[:, 0:1] = acc_i[...]
        out_ref[:, 1:2] = acc_p[...]
        out_ref[:, 2:3] = acc_t[...]


def dice_loss(outputs, targets, smooth=1e-6, gamma=2):
    """outputs: (N, C, H, W) float logits; targets: (N, H, W) int class ids."""
    N, C, H, W = outputs.shape
    HW = H * W

    # Free reshapes (NCHW is contiguous): no HBM transpose pass.
    x = outputs.reshape(N, C, HW)                     # (N, C, HW), dtype kept
    t = targets.reshape(N, 1, HW).astype(jnp.int32)   # (N, 1, HW)

    # Pixel tile on the lane axis.  32768 f32 lanes x 8 padded sublanes
    # = 1 MiB per logits buffer (x2 double-buffered) + same for the (padded)
    # targets buffer -> ~4.3 MiB, comfortably under every generation's
    # scoped-VMEM default, and big enough that DMA time per grid step
    # dominates the ~0.35 us per-step overhead.
    MAX_TN = 32768
    if HW <= MAX_TN:
        tn = HW                       # full extent is always a legal block
    else:
        tn = MAX_TN                   # multiple of 128
    num_tiles = pl.cdiv(HW, tn)
    need_mask = (HW % tn) != 0

    kernel = functools.partial(_dice_sums_kernel, gamma=gamma, hw=HW,
                               need_mask=need_mask)

    sums = pl.pallas_call(
        kernel,
        out_shape=jax.ShapeDtypeStruct((N, C, 3), jnp.float32),
        grid=(N, num_tiles),
        in_specs=[
            pl.BlockSpec((None, C, tn), lambda n, j: (n, 0, j)),
            pl.BlockSpec((None, 1, tn), lambda n, j: (n, 0, j)),
        ],
        out_specs=pl.BlockSpec((None, C, 3), lambda n, j: (n, 0, 0)),
        scratch_shapes=[
            pltpu.VMEM((C, 1), jnp.float32),
            pltpu.VMEM((C, 1), jnp.float32),
            pltpu.VMEM((C, 1), jnp.float32),
        ],
        compiler_params=pltpu.CompilerParams(
            dimension_semantics=("parallel", "arbitrary")),
    )(x, t)                                           # (N, C, 3)

    totals = jnp.sum(sums, axis=0)                    # (C, 3)
    intersection = totals[:, 0]
    union = totals[:, 1] + totals[:, 2]
    dice_scores = (2.0 * intersection + smooth) / (union + smooth)
    return 1.0 - jnp.mean(dice_scores)


def _dice_loss_ref(outputs, targets, smooth=1e-6, gamma=2):
    """Plain-JAX reference mirroring the PyTorch forward."""
    p = jax.nn.softmax(outputs, axis=1)               # (N, C, H, W)
    C = outputs.shape[1]
    scores = []
    for i in range(C):
        p_i = p[:, i, :, :]
        t_i = (targets == i).astype(jnp.float32)
        inter = jnp.sum(p_i * t_i)
        union = jnp.sum(p_i ** gamma) + jnp.sum(t_i ** gamma)
        scores.append((2.0 * inter + smooth) / (union + smooth))
    return 1.0 - jnp.mean(jnp.stack(scores))


if __name__ == "__main__":
    key = jax.random.PRNGKey(0)
    k1, k2 = jax.random.split(key)
    N, C, H, W = 2, 4, 16, 16
    outputs = jax.random.normal(k1, (N, C, H, W), dtype=jnp.float32)
    targets = jax.random.randint(k2, (N, H, W), 0, C, dtype=jnp.int32)

    loss = jax.jit(dice_loss)(outputs, targets)
    jax.block_until_ready(loss)

    ref = _dice_loss_ref(outputs, targets)
    np.testing.assert_allclose(np.asarray(loss), np.asarray(ref),
                               rtol=1e-5, atol=1e-6)
    print("KERNEL_OK")
</pallas_src>

<mosaic_0001>
module attributes {stable_mosaic.version = 11 : i64} {
  func.func @_dice_sums_kernel(%arg0: i32, %arg1: i32, %arg2: memref<1x4x256xf32, #tpu.memory_space<vmem>>, %arg3: memref<1x1x256xi32, #tpu.memory_space<vmem>>, %arg4: memref<1x4x3xf32, #tpu.memory_space<vmem>>, %arg5: memref<4x1xf32, #tpu.memory_space<vmem>>, %arg6: memref<4x1xf32, #tpu.memory_space<vmem>>, %arg7: memref<4x1xf32, #tpu.memory_space<vmem>>) attributes {dimension_semantics = [#tpu.dimension_semantics<parallel>, #tpu.dimension_semantics<arbitrary>], iteration_bounds = array<i64: 2, 1>, scalar_prefetch = 0 : i64, scratch_operands = 3 : i64, tpu.core_type = #tpu.core_type<tc>, window_params = [{transform_indices = @transform_0, window_bounds = array<i64: 1, 4, 256>}, {transform_indices = @transform_1, window_bounds = array<i64: 1, 1, 256>}, {transform_indices = @transform_2, window_bounds = array<i64: 1, 4, 3>}]} {
    %c0_i32 = arith.constant 0 : i32
    %0 = arith.cmpi eq, %arg1, %c0_i32 : i32
    %1 = arith.extui %0 : i1 to i32
    %c0_i32_0 = arith.constant 0 : i32
    %2 = arith.cmpi ne, %1, %c0_i32_0 : i32
    scf.if %2 {
      %cst_24 = arith.constant 0.000000e+00 : f32
      %41 = vector.broadcast %cst_24 : f32 to vector<4x1xf32>
      %c0_25 = arith.constant 0 : index
      %c0_26 = arith.constant 0 : index
      %42 = vector.load %arg5[%c0_25, %c0_26] : memref<4x1xf32, #tpu.memory_space<vmem>>, vector<4x1xf32>
      tpu.vector_store %arg5[%c0_25, %c0_26], %41 {strides = array<i32>} : memref<4x1xf32, #tpu.memory_space<vmem>>, vector<4x1xf32>,
      %cst_27 = arith.constant 0.000000e+00 : f32
      %43 = vector.broadcast %cst_27 : f32 to vector<4x1xf32>
      %c0_28 = arith.constant 0 : index
      %c0_29 = arith.constant 0 : index
      %44 = vector.load %arg6[%c0_28, %c0_29] : memref<4x1xf32, #tpu.memory_space<vmem>>, vector<4x1xf32>
      tpu.vector_store %arg6[%c0_28, %c0_29], %43 {strides = array<i32>} : memref<4x1xf32, #tpu.memory_space<vmem>>, vector<4x1xf32>,
      %cst_30 = arith.constant 0.000000e+00 : f32
      %45 = vector.broadcast %cst_30 : f32 to vector<4x1xf32>
      %c0_31 = arith.constant 0 : index
      %c0_32 = arith.constant 0 : index
      %46 = vector.load %arg7[%c0_31, %c0_32] : memref<4x1xf32, #tpu.memory_space<vmem>>, vector<4x1xf32>
      tpu.vector_store %arg7[%c0_31, %c0_32], %45 {strides = array<i32>} : memref<4x1xf32, #tpu.memory_space<vmem>>, vector<4x1xf32>,
    } else {
    }
    %c0 = arith.constant 0 : index
    %c0_1 = arith.constant 0 : index
    %c0_2 = arith.constant 0 : index
    %3 = vector.load %arg2[%c0, %c0_1, %c0_2] : memref<1x4x256xf32, #tpu.memory_space<vmem>>, vector<1x4x256xf32>
    %4 = vector.shape_cast %3 : vector<1x4x256xf32> to vector<4x256xf32>
    %cst = arith.constant dense<0xFF800000> : vector<256xf32>
    %5 = vector.multi_reduction <maximumf>, %4, %cst [0] : vector<4x256xf32> to vector<256xf32>
    %6 = vector.shape_cast %5 : vector<256xf32> to vector<1x256xf32>
    %7 = vector.broadcast %6 : vector<1x256xf32> to vector<4x256xf32>
    %8 = arith.subf %4, %7 : vector<4x256xf32>
    %9 = math.exp %8 : vector<4x256xf32>
    %cst_3 = arith.constant dense<0.000000e+00> : vector<256xf32>
    %10 = vector.multi_reduction <add>, %9, %cst_3 [0] : vector<4x256xf32> to vector<256xf32>
    %11 = vector.shape_cast %10 : vector<256xf32> to vector<1x256xf32>
    %12 = vector.broadcast %11 : vector<1x256xf32> to vector<4x256xf32>
    %13 = arith.divf %9, %12 : vector<4x256xf32>
    %c0_4 = arith.constant 0 : index
    %c0_5 = arith.constant 0 : index
    %c0_6 = arith.constant 0 : index
    %14 = vector.load %arg3[%c0_4, %c0_5, %c0_6] : memref<1x1x256xi32, #tpu.memory_space<vmem>>, vector<1x1x256xi32>
    %15 = vector.shape_cast %14 : vector<1x1x256xi32> to vector<1x256xi32>
    %16 = tpu.iota {dimensions = array<i32: 0>} : vector<4x256xi32>
    %17 = vector.broadcast %15 : vector<1x256xi32> to vector<4x256xi32>
    %18 = arith.cmpi eq, %17, %16 : vector<4x256xi32>
    %19 = arith.extui %18 : vector<4x256xi1> to vector<4x256xi32>
    %20 = arith.sitofp %19 : vector<4x256xi32> to vector<4x256xf32>
    %21 = arith.mulf %13, %13 : vector<4x256xf32>
    %c0_7 = arith.constant 0 : index
    %c0_8 = arith.constant 0 : index
    %22 = vector.load %arg5[%c0_7, %c0_8] : memref<4x1xf32, #tpu.memory_space<vmem>>, vector<4x1xf32>
    %23 = arith.mulf %13, %20 : vector<4x256xf32>
    %cst_9 = arith.constant dense<0.000000e+00> : vector<4xf32>
    %24 = vector.multi_reduction <add>, %23, %cst_9 [1] : vector<4x256xf32> to vector<4xf32>
    %25 = vector.shape_cast %24 : vector<4xf32> to vector<4x1xf32>
    %26 = arith.addf %22, %25 : vector<4x1xf32>
    %c0_10 = arith.constant 0 : index
    %c0_11 = arith.constant 0 : index
    %27 = vector.load %arg5[%c0_10, %c0_11] : memref<4x1xf32, #tpu.memory_space<vmem>>, vector<4x1xf32>
    tpu.vector_store %arg5[%c0_10, %c0_11], %26 {strides = array<i32>} : memref<4x1xf32, #tpu.memory_space<vmem>>, vector<4x1xf32>,
    %c0_12 = arith.constant 0 : index
    %c0_13 = arith.constant 0 : index
    %28 = vector.load %arg6[%c0_12, %c0_13] : memref<4x1xf32, #tpu.memory_space<vmem>>, vector<4x1xf32>
    %cst_14 = arith.constant dense<0.000000e+00> : vector<4xf32>
    %29 = vector.multi_reduction <add>, %21, %cst_14 [1] : vector<4x256xf32> to vector<4xf32>
    %30 = vector.shape_cast %29 : vector<4xf32> to vector<4x1xf32>
    %31 = arith.addf %28, %30 : vector<4x1xf32>
    %c0_15 = arith.constant 0 : index
    %c0_16 = arith.constant 0 : index
    %32 = vector.load %arg6[%c0_15, %c0_16] : memref<4x1xf32, #tpu.memory_space<vmem>>, vector<4x1xf32>
    tpu.vector_store %arg6[%c0_15, %c0_16], %31 {strides = array<i32>} : memref<4x1xf32, #tpu.memory_space<vmem>>, vector<4x1xf32>,
    %c0_17 = arith.constant 0 : index
    %c0_18 = arith.constant 0 : index
    %33 = vector.load %arg7[%c0_17, %c0_18] : memref<4x1xf32, #tpu.memory_space<vmem>>, vector<4x1xf32>
    %cst_19 = arith.constant dense<0.000000e+00> : vector<4xf32>
    %34 = vector.multi_reduction <add>, %20, %cst_19 [1] : vector<4x256xf32> to vector<4xf32>
    %35 = vector.shape_cast %34 : vector<4xf32> to vector<4x1xf32>
    %36 = arith.addf %33, %35 : vector<4x1xf32>
    %c0_20 = arith.constant 0 : index
    %c0_21 = arith.constant 0 : index
    %37 = vector.load %arg7[%c0_20, %c0_21] : memref<4x1xf32, #tpu.memory_space<vmem>>, vector<4x1xf32>
    tpu.vector_store %arg7[%c0_20, %c0_21], %36 {strides = array<i32>} : memref<4x1xf32, #tpu.memory_space<vmem>>, vector<4x1xf32>,
    %c0_i32_22 = arith.constant 0 : i32
    %38 = arith.cmpi eq, %arg1, %c0_i32_22 : i32
    %39 = arith.extui %38 : i1 to i32
    %c0_i32_23 = arith.constant 0 : i32
    %40 = arith.cmpi ne, %39, %c0_i32_23 : i32
    scf.if %40 {
      %c0_24 = arith.constant 0 : index
      %c0_25 = arith.constant 0 : index
      %41 = vector.load %arg5[%c0_24, %c0_25] : memref<4x1xf32, #tpu.memory_space<vmem>>, vector<4x1xf32>
      %c0_26 = arith.constant 0 : index
      %c0_27 = arith.constant 0 : index
      %c0_28 = arith.constant 0 : index
      %42 = vector.load %arg4[%c0_26, %c0_27, %c0_28] : memref<1x4x3xf32, #tpu.memory_space<vmem>>, vector<1x4x1xf32>
      %43 = vector.shape_cast %42 : vector<1x4x1xf32> to vector<4x1xf32>
      %44 = vector.shape_cast %41 : vector<4x1xf32> to vector<1x4x1xf32>
      tpu.vector_store %arg4[%c0_26, %c0_27, %c0_28], %44 {strides = array<i32>} : memref<1x4x3xf32, #tpu.memory_space<vmem>>, vector<1x4x1xf32>,
      %c0_29 = arith.constant 0 : index
      %c0_30 = arith.constant 0 : index
      %45 = vector.load %arg6[%c0_29, %c0_30] : memref<4x1xf32, #tpu.memory_space<vmem>>, vector<4x1xf32>
      %c0_31 = arith.constant 0 : index
      %c0_32 = arith.constant 0 : index
      %c1 = arith.constant 1 : index
      %46 = vector.load %arg4[%c0_31, %c0_32, %c1] : memref<1x4x3xf32, #tpu.memory_space<vmem>>, vector<1x4x1xf32>
      %47 = vector.shape_cast %46 : vector<1x4x1xf32> to vector<4x1xf32>
      %48 = vector.shape_cast %45 : vector<4x1xf32> to vector<1x4x1xf32>
      tpu.vector_store %arg4[%c0_31, %c0_32, %c1], %48 {strides = array<i32>} : memref<1x4x3xf32, #tpu.memory_space<vmem>>, vector<1x4x1xf32>,
      %c0_33 = arith.constant 0 : index
      %c0_34 = arith.constant 0 : index
      %49 = vector.load %arg7[%c0_33, %c0_34] : memref<4x1xf32, #tpu.memory_space<vmem>>, vector<4x1xf32>
      %c0_35 = arith.constant 0 : index
      %c0_36 = arith.constant 0 : index
      %c2 = arith.constant 2 : index
      %50 = vector.load %arg4[%c0_35, %c0_36, %c2] : memref<1x4x3xf32, #tpu.memory_space<vmem>>, vector<1x4x1xf32>
      %51 = vector.shape_cast %50 : vector<1x4x1xf32> to vector<4x1xf32>
      %52 = vector.shape_cast %49 : vector<4x1xf32> to vector<1x4x1xf32>
      tpu.vector_store %arg4[%c0_35, %c0_36, %c2], %52 {strides = array<i32>} : memref<1x4x3xf32, #tpu.memory_space<vmem>>, vector<1x4x1xf32>,
    } else {
    }
    return
  }
  func.func @transform_0(%arg0: i32, %arg1: i32) -> (i32, i32, i32) {
    %c0_i32 = arith.constant 0 : i32
    %c0_i32_0 = arith.constant 0 : i32
    return %arg0, %c0_i32, %arg1 : i32, i32, i32
  }
  func.func @transform_1(%arg0: i32, %arg1: i32) -> (i32, i32, i32) {
    %c0_i32 = arith.constant 0 : i32
    %c0_i32_0 = arith.constant 0 : i32
    return %arg0, %c0_i32, %arg1 : i32, i32, i32
  }
  func.func @transform_2(%arg0: i32, %arg1: i32) -> (i32, i32, i32) {
    %c0_i32 = arith.constant 0 : i32
    %c0_i32_0 = arith.constant 0 : i32
    %c0_i32_1 = arith.constant 0 : i32
    return %arg0, %c0_i32, %c0_i32_0 : i32, i32, i32
  }
}

</mosaic_0001>

<llo_original>
// kernel: dice_loss.1
$region0: #{dice_loss.1}
  #allocation0 [shape = 'u32[]', space=smem, size = 0x4, offset = 0x4, fixed_abs, tag = 'smem constant byte address 0x4 - core index']
  #allocation1 [shape = 'u32[72,128]{1,0:T(1,128)}', space=vmem, size = 0x9000, scoped, tag = 'internal scratch']
  #allocation2 [shape = 'f32[4,1]{1,0:T(4,128)}', space=vmem, size = 0x800, scoped, tag = 'scratch operand']
  #allocation3 [shape = 'f32[4,1]{1,0:T(4,128)}', space=vmem, size = 0x800, scoped, tag = 'scratch operand']
  #allocation4 [shape = 'f32[4,1]{1,0:T(4,128)}', space=vmem, size = 0x800, scoped, tag = 'scratch operand']
  %s0 = inlined_call_operand.vmem [shape: f32[2,4,256], index: 0, kind: input, shape index: {}]
  %s1 = inlined_call_operand.vmem [shape: s32[2,1,256], index: 1, kind: input, shape index: {}]
  %s2 = inlined_call_operand.vmem [shape: f32[2,4,3], index: 2, kind: output, shape index: {}]
  %s3 = sld [smem:[#allocation0]]
  $region49: #{dice_loss.1} parent=0
    _
  %s5 = ssub.s32 1, %s3
  %s6 = scalar_select 0, %s5, %s3
  loop: start=0, step=1, limit=4
  $region2: #{dice_loss.1} parent=0 // loop_pre_header
    _
  $region3: #{dice_loss.1} parent=0 // loop_header
    %s8 = sphi 0, %s12
    %p9 = scmp.ge.s32.totalorder %s8, 4
    %s15 = sphi 0, %s27
    %s16 = sphi 0, %s23
    %s17 = sphi 0, %s15
    %s18 = sphi 0, %s16
    %s19 = sphi 0, %s17
    %s20 = sphi 0, %s18
    %s32 = sphi 0, %s34
    %s35 = sphi 0, %s32
    %s36 = sphi 0, %s35
    %s52 = sphi 0, %s36
    %s60 = sphi 0, %s62
    %s63 = sphi 0, %s60
    %s64 = sphi 0, %s63
    %s80 = sphi 0, %s64
    %s86 = sphi 0, %s88
    %s89 = sphi 0, %s86
    %s90 = sphi 0, %s89
    %s106 = sphi 0, %s90
  $region4: #{dice_loss.1} parent=0 // loop_header_branch
    %11 = sbr.rel (%p9) target = $region8
  $region5: #{dice_loss.1} parent=0 // loop_body
    %s13 = ssub.s32 %s8, 1
    %s14 = ssub.s32 %s8, 2
    %s21 = sadd.s32 1, %s16
    %p22 = scmp.ge.s32.totalorder %s21, 1
    %s23 = scalar_select %p22, 0, %s21
    %s24 = sadd.s32 1, %s15
    %s25 = scalar_select %p22, %s24, %s15
    %p26 = scmp.ge.s32.totalorder %s25, 2
    %s27 = scalar_select %p26, 0, %s25
    %s28 = ssub.s32 %s15, %s27
    %s29 = ssub.s32 %s16, %s23
    %s30 = sor.u32 %s28, %s29
    %p31 = scmp.eq.s32.totalorder %s30, 0
    %s33 = sadd.s32 %s32, 1
    %s34 = scalar_select %p31, %s32, %s33
    %p37 = pneg %p31
    %p38 = scmp.eq.s32.totalorder %s8, 1
    %p39 = por %p37, %p38
    %p40 = scmp.ne.s32.totalorder %s32, %s35
    %p41 = scmp.eq.s32.totalorder %s8, 0
    %p42 = por %p40, %p41
    %p43 = scmp.ne.s32.totalorder %s32, %s35
    %p44 = scmp.eq.s32.totalorder %s13, 1
    %p45 = por %p43, %p44
    %p46 = scmp.ne.s32.totalorder %s35, %s36
    %p47 = scmp.eq.s32.totalorder %s13, 0
    %p48 = por %p46, %p47
    %p49 = scmp.ne.s32.totalorder %s35, %s36
    %p50 = scmp.eq.s32.totalorder %s14, 1
    %p51 = por %p49, %p50
    %p53 = scmp.ne.s32.totalorder %s36, %s52
    %p54 = scmp.eq.s32.totalorder %s14, 0
    %p55 = por %p53, %p54
    %s56 = ssub.s32 %s15, %s27
    %s57 = ssub.s32 %s16, %s23
    %s58 = sor.u32 %s56, %s57
    %p59 = scmp.eq.s32.totalorder %s58, 0
    %s61 = sadd.s32 %s60, 1
    %s62 = scalar_select %p59, %s60, %s61
    %p65 = pneg %p59
    %p66 = scmp.eq.s32.totalorder %s8, 1
    %p67 = por %p65, %p66
    %p68 = scmp.ne.s32.totalorder %s60, %s63
    %p69 = scmp.eq.s32.totalorder %s8, 0
    %p70 = por %p68, %p69
    %p71 = scmp.ne.s32.totalorder %s60, %s63
    %p72 = scmp.eq.s32.totalorder %s13, 1
    %p73 = por %p71, %p72
    %p74 = scmp.ne.s32.totalorder %s63, %s64
    %p75 = scmp.eq.s32.totalorder %s13, 0
    %p76 = por %p74, %p75
    %p77 = scmp.ne.s32.totalorder %s63, %s64
    %p78 = scmp.eq.s32.totalorder %s14, 1
    %p79 = por %p77, %p78
    %p81 = scmp.ne.s32.totalorder %s64, %s80
    %p82 = scmp.eq.s32.totalorder %s14, 0
    %p83 = por %p81, %p82
    %s84 = ssub.s32 %s15, %s27
    %p85 = scmp.eq.s32.totalorder %s84, 0
    %s87 = sadd.s32 %s86, 1
    %s88 = scalar_select %p85, %s86, %s87
    %p91 = pneg %p85
    %p92 = scmp.eq.s32.totalorder %s8, 1
    %p93 = por %p91, %p92
    %p94 = scmp.ne.s32.totalorder %s86, %s89
    %p95 = scmp.eq.s32.totalorder %s8, 0
    %p96 = por %p94, %p95
    %p97 = scmp.ne.s32.totalorder %s86, %s89
    %p98 = scmp.eq.s32.totalorder %s13, 1
    %p99 = por %p97, %p98
    %p100 = scmp.ne.s32.totalorder %s89, %s90
    %p101 = scmp.eq.s32.totalorder %s13, 0
    %p102 = por %p100, %p101
    %p103 = scmp.ne.s32.totalorder %s89, %s90
    %p104 = scmp.eq.s32.totalorder %s14, 1
    %p105 = por %p103, %p104
    %p107 = scmp.ne.s32.totalorder %s90, %s106
    %p108 = scmp.eq.s32.totalorder %s14, 0
    %p109 = por %p107, %p108
    %p110 = scmp.le.s32.totalorder 1, %s8
    %p111 = scmp.lt.s32.totalorder %s8, 3
    %p112 = pnand %p110, %p111
    %p113 = pneg %p112
    // Predicated region
    $region9: #{dice_loss.1} parent=5 // pred_check
      _
    $region10: #{dice_loss.1} parent=5 // pred_check_branch
      %115 = sbr.rel (%p112) target = $region12
    $region11: #{dice_loss.1} parent=5 // pred_region
      %s116 = ssub.s32 %s8, 1
    $region12: #{dice_loss.1} parent=5 // pred_fallthru
      _
    %p117 = scmp.lt.s32.totalorder %s8, 2
    // Predicated region
    $region13: #{dice_loss.1} parent=5 // pred_check
      %p118 = pneg %p117
    $region14: #{dice_loss.1} parent=5 // pred_check_branch
      %120 = sbr.rel (%p118) target = $region16
    $region15: #{dice_loss.1} parent=5 // pred_region
      // Predicated region
      $region17: #{dice_loss.1} parent=15 // pred_check
        %p121 = pneg %p42
      $region18: #{dice_loss.1} parent=15 // pred_check_branch
        %123 = sbr.rel (%p121) target = $region20
      $region19: #{dice_loss.1} parent=15 // pred_region
        %s124 = smul.u32 2, %s16
        %p125 = scmp.lt.s32.totalorder %s15, 1
        %s126 = scalar_select %p125, %s15, 1
        %p127 = scmp.lt.s32.totalorder %s124, 1
        %s128 = scalar_select %p127, %s124, 1
        %s129 = smul.addr %s126, 2
        %s130 = sadd.s32 %s128, %s129
        %s131 = smul.addr %s130, 4
        %s132 = scalar_lea.vmem %s0, %s131
        %s133 = smul.u32 2, %s16
      $region20: #{dice_loss.1} parent=15 // pred_fallthru
        _
      // Predicated region
      $region21: #{dice_loss.1} parent=15 // pred_check
        %p134 = pneg %p70
      $region22: #{dice_loss.1} parent=15 // pred_check_branch
        %136 = sbr.rel (%p134) target = $region24
      $region23: #{dice_loss.1} parent=15 // pred_region
        %s137 = smul.u32 2, %s16
        %p138 = scmp.lt.s32.totalorder %s15, 1
        %s139 = scalar_select %p138, %s15, 1
        %p140 = scmp.lt.s32.totalorder %s137, 1
        %s141 = scalar_select %p140, %s137, 1
        %s142 = smul.addr %s139, 2
        %s143 = sadd.s32 %s141, %s142
        %s144 = scalar_lea.vmem %s1, %s143
        %s145 = smul.u32 2, %s16
      $region24: #{dice_loss.1} parent=15 // pred_fallthru
        _
    $region16: #{dice_loss.1} parent=5 // pred_fallthru
      _
    %p146 = scmp.le.s32.totalorder 1, %s8
    %p147 = scmp.lt.s32.totalorder %s8, 3
    %p148 = pnand %p146, %p147
    %p149 = pneg %p148
    // Predicated region
    $region25: #{dice_loss.1} parent=5 // pred_check
      _
    $region26: #{dice_loss.1} parent=5 // pred_check_branch
      %151 = sbr.rel (%p148) target = $region28
    $region27: #{dice_loss.1} parent=5 // pred_region
      %s152 = ssub.s32 %s8, 1
      %s153 = smul.u32 2, %s18
      %p154 = scmp.lt.s32.totalorder %s17, 1
      %s155 = scalar_select %p154, %s17, 1
      %p156 = scmp.lt.s32.totalorder %s153, 1
      %s157 = scalar_select %p156, %s153, 1
      %s158 = smul.addr %s155, 2
      %s159 = sadd.s32 %s157, %s158
      %s160 = smul.addr %s159, 4
      %s161 = scalar_lea.vmem %s0, %s160
      %p162 = pneg %p48
      %p163 = pneg %p45
      %s164 = smul.u32 2, %s18
      %p165 = scmp.lt.s32.totalorder %s17, 1
      %s166 = scalar_select %p165, %s17, 1
      %p167 = scmp.lt.s32.totalorder %s164, 1
      %s168 = scalar_select %p167, %s164, 1
      %s169 = smul.addr %s166, 2
      %s170 = sadd.s32 %s168, %s169
      %s171 = scalar_lea.vmem %s1, %s170
      %p172 = pneg %p76
      %p173 = pneg %p73
      %p174 = pneg %p102
      %p175 = pneg %p99
      %p176 = scmp.lt.s32.totalorder %s17, 1
      %s177 = scalar_select %p176, %s17, 1
      %s178 = smul.addr %s177, 4
      %s179 = scalar_lea.vmem %s2, %s178
      %s180 = smul.u32 2, %s18
      %p181 = scmp.lt.s32.totalorder %s17, 1
      %s182 = scalar_select %p181, %s17, 1
      %p183 = scmp.lt.s32.totalorder %s180, 1
      %s184 = scalar_select %p183, %s180, 1
      %s185 = smul.addr %s182, 2
      %s186 = sadd.s32 %s184, %s185
      %s187 = smul.addr %s186, 4
      %s188 = scalar_lea.vmem %s0, %s187
      %s189 = smul.u32 2, %s18
      %s190 = smul.u32 2, %s18
      %p191 = scmp.lt.s32.totalorder %s17, 1
      %s192 = scalar_select %p191, %s17, 1
      %p193 = scmp.lt.s32.totalorder %s190, 1
      %s194 = scalar_select %p193, %s190, 1
      %s195 = smul.addr %s192, 2
      %s196 = sadd.s32 %s194, %s195
      %s197 = scalar_lea.vmem %s1, %s196
      %s198 = smul.u32 2, %s18
      %p199 = scmp.lt.s32.totalorder %s17, 1
      %s200 = scalar_select %p199, %s17, 1
      %s201 = smul.addr %s200, 4
      %s202 = scalar_lea.vmem %s2, %s201
      %p203 = scmp.eq.s32.totalorder %s18, 0
      // Predicated region
      $region29: #{dice_loss.1} parent=27 // pred_check
        %p204 = pneg %p203
      $region30: #{dice_loss.1} parent=27 // pred_check_branch
        %206 = sbr.rel (%p204) target = $region32
      $region31: #{dice_loss.1} parent=27 // pred_region
        %vm207 = vcmask 3072
        %208 = vst.msk [vmem:[#allocation2] sm:$0xf] %vm207, 0.0
        %209 = vst.msk [vmem:[#allocation3] sm:$0xf] %vm207, 0.0
        %210 = vst.msk [vmem:[#allocation4] sm:$0xf] %vm207, 0.0
      $region32: #{dice_loss.1} parent=27 // pred_fallthru
        _
      %v211 = vld [vmem:[%s188] sm:$0xff]
      %213 = vst [vmem:[#allocation1] ss:$2 sm:$0xff] %v211
      %v214 = vld.sshfl [vmem:[#allocation1] sm:$0xff pattern:$0x75316420]
      %v215 = vld.sshfl [vmem:[#allocation1 + $0x8] sm:$0xff pattern:$0x75316420]
      %vm218 = vcmask 1043456
      %v219 = vsel %vm218, %v214, -inf
      %v220 = vrot.slane %v219, 4
      %v221 = vmax.f32 %v219, %v220
      %v222 = vrot.slane %v221, 2
      %v223 = vmax.f32 %v221, %v222
      %v224 = vrot.slane %v223, 1
      %v225 = vmax.f32 %v223, %v224
      %v226 = vsel %vm218, %v215, -inf
      %v227 = vrot.slane %v226, 4
      %v228 = vmax.f32 %v226, %v227
      %v229 = vrot.slane %v228, 2
      %v230 = vmax.f32 %v228, %v229
      %v231 = vrot.slane %v230, 1
      %v232 = vmax.f32 %v230, %v231
      %v235 = vrot.slane %v232, 4
      %v236 = vsel %vm218, %v225, %v235
      %v238 = vsub.f32 %v211, %v236
      %v239 = vmul.f32 %v238, 1.442695
      %v240 = vpow.pop %v239
      %242 = vst [vmem:[#allocation1] ss:$2 sm:$0xff] %v240
      %v243 = vld.sshfl [vmem:[#allocation1] sm:$0xff pattern:$0x75316420]
      %v244 = vld.sshfl [vmem:[#allocation1 + $0x8] sm:$0xff pattern:$0x75316420]
      %v247 = vsel %vm218, %v243, 0.0
      %v248 = vrot.slane %v247, 4
      %v249 = vadd.f32 %v247, %v248
      %v250 = vrot.slane %v249, 2
      %v251 = vadd.f32 %v249, %v250
      %v252 = vrot.slane %v251, 1
      %v253 = vadd.f32 %v251, %v252
      %v254 = vsel %vm218, %v244, 0.0
      %v255 = vrot.slane %v254, 4
      %v256 = vadd.f32 %v254, %v255
      %v257 = vrot.slane %v256, 2
      %v258 = vadd.f32 %v256, %v257
      %v259 = vrot.slane %v258, 1
      %v260 = vadd.f32 %v258, %v259
      %v263 = vrot.slane %v260, 4
      %v264 = vsel %vm218, %v253, %v263
      %v266 = vrcp.pop %v264
      %v267 = vmul.f32 %v264, %v266
      %v268 = vsub.f32 1.0, %v267
      %v269 = vmul.f32 %v266, %v268
      %v270 = vadd.f32 %v266, %v269
      %vm271 = vweird.f32 %v264
      %vm272 = vweird.f32 %v266
      %vm273 = vmor %vm271, %vm272
      %v274 = vsel %vm273, %v266, %v270
      %v275 = vand.u32 2147483647, %v264
      %vm276 = vcmp.eq.f32.partialorder %v275, 8.507059e+37
      %v277 = vand.u32 %v264, 2147483648
      %v278 = vor.u32 1.1754944e-38, %v277
      %v279 = vsel %vm276, %v278, %v274
      %v280 = vmul.f32 %v240, %v279
      %v281 = vld [vmem:[%s197] sm:$0x3]
      %v282 = vlaneseq
      %v283 = vshrl.u32 %v282, 7
      %v284 = vperm.slane %v281, 0
      %v285 = vperm.slane %v281, 1
      %vm286 = vcmp.eq.s32.totalorder %v284, %v283
      %vm287 = vcmp.eq.s32.totalorder %v285, %v283
      %v288 = vsel %vm286, 1, 0
      %v289 = vsel %vm287, 1, 0
      %v290 = vcvt.s32.f32 %v288
      %v291 = vcvt.s32.f32 %v289
      %v292 = vmul.f32 %v280, %v280
      %v293 = vld [vmem:[#allocation2] sm:$0xf]
      %v296 = vrot.slane %v291, 4
      %v297 = vsel %vm218, %v290, %v296
      %v299 = vmul.f32 %v280, %v297
      %301 = vst [vmem:[#allocation1] ss:$2 sm:$0xff] %v299
      %v302 = vld.sshfl [vmem:[#allocation1] sm:$0xff pattern:$0x75316420]
      %v303 = vld.sshfl [vmem:[#allocation1 + $0x8] sm:$0xff pattern:$0x75316420]
      %v306 = vsel %vm218, %v302, 0.0
      %v307 = vsel %vm218, %v303, 0.0
      %v308 = vadd.f32 %v306, %v307
      %309 = vadd.xlane.f32.xlu0 %v308
      %v310 = vpop.xlane.xlu0 %309
      %v311 = vadd.f32 %v293, %v310
      %vm312 = vcmask 3072
      %313 = vst.msk [vmem:[#allocation2] sm:$0xf] %vm312, %v311
      %v314 = vld [vmem:[#allocation3] sm:$0xf]
      %316 = vst [vmem:[#allocation1] ss:$2 sm:$0xff] %v292
      %v317 = vld.sshfl [vmem:[#allocation1] sm:$0xff pattern:$0x75316420]
      %v318 = vld.sshfl [vmem:[#allocation1 + $0x8] sm:$0xff pattern:$0x75316420]
      %v321 = vsel %vm218, %v317, 0.0
      %v322 = vsel %vm218, %v318, 0.0
      %v323 = vadd.f32 %v321, %v322
      %324 = vadd.xlane.f32.xlu0 %v323
      %v325 = vpop.xlane.xlu0 %324
      %v326 = vadd.f32 %v314, %v325
      %327 = vst.msk [vmem:[#allocation3] sm:$0xf] %vm312, %v326
      %v328 = vld [vmem:[#allocation4] sm:$0xf]
      %v329 = vsel %vm218, %v290, 0.0
      %v330 = vsel %vm218, %v291, 0.0
      %v331 = vadd.f32 %v329, %v330
      %332 = vadd.xlane.f32.xlu0 %v331
      %v333 = vpop.xlane.xlu0 %332
      %v334 = vadd.f32 %v328, %v333
      %335 = vst.msk [vmem:[#allocation4] sm:$0xf] %vm312, %v334
      // Predicated region
      $region33: #{dice_loss.1} parent=27 // pred_check
        %p336 = pneg %p203
      $region34: #{dice_loss.1} parent=27 // pred_check_branch
        %338 = sbr.rel (%p336) target = $region36
      $region35: #{dice_loss.1} parent=27 // pred_region
        %v339 = vld [vmem:[#allocation2] sm:$0xf]
        %340 = vst.msk [vmem:[%s202] sm:$0xf] %vm312, %v339
        %v341 = vld [vmem:[#allocation3] sm:$0xf]
        %343 = vrot.lane.b32.xlu0 %v341, 1
        %v344 = vpop.permute.xlu0 %343
        %vm346 = vcmask 11272
        %347 = vst.msk [vmem:[%s202] sm:$0xf] %vm346, %v344
        %v348 = vld [vmem:[#allocation4] sm:$0xf]
        %350 = vrot.lane.b32.xlu0 %v348, 2
        %v351 = vpop.permute.xlu0 %350
        %vm353 = vcmask 19472
        %354 = vst.msk [vmem:[%s202] sm:$0xf] %vm353, %v351
      $region36: #{dice_loss.1} parent=27 // pred_fallthru
        _
      %p355 = scmp.lt.s32.totalorder %s17, 1
      %s356 = scalar_select %p355, %s17, 1
      %s357 = smul.addr %s356, 4
      %s358 = scalar_lea.vmem %s2, %s357
      // Predicated region
      $region37: #{dice_loss.1} parent=27 // pred_check
        %p359 = pneg %p99
      $region38: #{dice_loss.1} parent=27 // pred_check_branch
        %361 = sbr.rel (%p359) target = $region40
      $region39: #{dice_loss.1} parent=27 // pred_region
        _
      $region40: #{dice_loss.1} parent=27 // pred_fallthru
        _
    $region28: #{dice_loss.1} parent=5 // pred_fallthru
      _
    %p362 = scmp.le.s32.totalorder 2, %s8
    // Predicated region
    $region41: #{dice_loss.1} parent=5 // pred_check
      %p363 = pneg %p362
    $region42: #{dice_loss.1} parent=5 // pred_check_branch
      %365 = sbr.rel (%p363) target = $region44
    $region43: #{dice_loss.1} parent=5 // pred_region
      %s366 = ssub.s32 %s8, 2
      // Predicated region
      $region45: #{dice_loss.1} parent=43 // pred_check
        %p367 = pneg %p105
      $region46: #{dice_loss.1} parent=43 // pred_check_branch
        %369 = sbr.rel (%p367) target = $region48
      $region47: #{dice_loss.1} parent=43 // pred_region
        %p370 = scmp.lt.s32.totalorder %s19, 1
        %s371 = scalar_select %p370, %s19, 1
        %s372 = smul.addr %s371, 4
        %s373 = scalar_lea.vmem %s2, %s372
      $region48: #{dice_loss.1} parent=43 // pred_fallthru
        _
    $region44: #{dice_loss.1} parent=5 // pred_fallthru
      _
  $region6: #{dice_loss.1} parent=0 // loop_footer
    %s12 = sadd.s32 1, %s8
  $region7: #{dice_loss.1} parent=0 // loop_footer_branch
    %7 = sbr.rel target = $region3
  $region8: #{dice_loss.1} parent=0 // loop_exit
    _

</llo_original>
